<compile_context>
chip_gen: v6e
topology: v6e:2x2x1
jax: 0.10.0
libtpu: 0.0.40
codegen_flags: <defaults>
</compile_context>

<pallas_src>
import functools

import jax
import jax.numpy as jnp
from jax.experimental import pallas as pl
from jax.experimental.pallas import tpu as pltpu

_MiB = 1024 * 1024
# Use the VMEM-resident-weights kernel only when 2x (double-buffer worst case)
# the weight+bias stacks fit comfortably inside the smallest scoped-VMEM
# default (v5e: 16 MiB).
_RESIDENT_WEIGHT_BUDGET = 12 * _MiB


def _round_up(x, m):
    return ((x + m - 1) // m) * m


def _pick_tile_m(m):
    """Bucketed batch-tile size (fixed set -> no per-batch-size recompiles)."""
    if m <= 128:
        return _round_up(max(m, 1), 8)
    if m <= 512:
        return 128        # >= 2 batch tiles -> both v7x TensorCores get work
    if m <= 2048:
        return 256
    return 512


# ---------------------------------------------------------------------------
# Kernel A (preferred): weights VMEM-resident, layer loop unrolled in-kernel.
# grid = (batch_tiles,).  w_ref/b_ref are the FULL stacks (constant block
# index), fetched from HBM once; the activation lives in vregs/VMEM values.
# ---------------------------------------------------------------------------
def _mlp_resident_kernel(x_ref, w_ref, b_ref, o_ref):
    n_layers = w_ref.shape[0]          # static
    out_pad = o_ref.shape[1]           # static, multiple of 128
    h = x_ref[...].astype(jnp.float32)
    for li in range(n_layers):         # static trip count -> fully unrolled
        y = jnp.dot(h.astype(w_ref.dtype), w_ref[li],
                    preferred_element_type=jnp.float32)
        # layer() = [Linear, ReLU] for every block (final block included).
        h = jnp.maximum(y + b_ref[li].astype(jnp.float32), 0.0)
    o_ref[...] = h[:, :out_pad].astype(o_ref.dtype)


# ---------------------------------------------------------------------------
# Kernel B (fallback for very large hidden_dim): weights streamed per layer,
# grid = (batch_tiles, n_layers), activation persisted in a VMEM scratch.
# ---------------------------------------------------------------------------
def _mlp_streamed_kernel(x_ref, w_ref, b_ref, o_ref, h_ref):
    li = pl.program_id(1)

    @pl.when(li == 0)
    def _():
        h_ref[...] = x_ref[...].astype(jnp.float32)

    y = jnp.dot(h_ref[...].astype(w_ref.dtype), w_ref[...],
                preferred_element_type=jnp.float32)
    h_ref[...] = jnp.maximum(y + b_ref[...].astype(jnp.float32), 0.0)

    @pl.when(li == pl.num_programs(1) - 1)
    def _():
        o_ref[...] = h_ref[:, :o_ref.shape[1]].astype(o_ref.dtype)


@functools.partial(
    jax.jit,
    static_argnames=("tile_m", "d_pad", "out_pad", "out_dim", "resident"))
def _mlp_forward(x, w_stack, b_stack, *, tile_m, d_pad, out_pad, out_dim,
                 resident):
    m, in_dim = x.shape
    n_layers = w_stack.shape[0]
    m_pad = _round_up(m, tile_m)
    m_tiles = m_pad // tile_m

    # Zero-pad batch to a tile multiple and features to the common padded dim.
    # Padding is exact: padded W rows/cols and bias lanes are 0, ReLU(0)=0.
    x_pad = jnp.zeros((m_pad, d_pad), jnp.float32)
    x_pad = x_pad.at[:m, :in_dim].set(x.astype(jnp.float32))

    flops = 2 * m_pad * d_pad * d_pad * n_layers
    wbytes = int(w_stack.size) * w_stack.dtype.itemsize
    bbytes = int(b_stack.size) * b_stack.dtype.itemsize
    io_bytes = 4 * (int(x_pad.size) + m_pad * out_pad)

    if resident:
        grid = (m_tiles,)
        in_specs = [
            pl.BlockSpec((tile_m, d_pad), lambda mi: (mi, 0)),
            # Full weight / bias stacks, constant block index -> one HBM fetch,
            # VMEM-resident across every batch tile.
            pl.BlockSpec((n_layers, d_pad, d_pad), lambda mi: (0, 0, 0)),
            pl.BlockSpec((n_layers, 1, d_pad), lambda mi: (0, 0, 0)),
        ]
        out_specs = pl.BlockSpec((tile_m, out_pad), lambda mi: (mi, 0))
        scratch_shapes = []
        kernel = _mlp_resident_kernel
        semantics = ("parallel",)
        bytes_accessed = io_bytes + wbytes + bbytes
        vmem_need = (2 * 4 * tile_m * (d_pad + out_pad)
                     + 2 * (wbytes + bbytes))
    else:
        grid = (m_tiles, n_layers)
        in_specs = [
            pl.BlockSpec((tile_m, d_pad), lambda mi, li: (mi, 0)),
            pl.BlockSpec((None, d_pad, d_pad), lambda mi, li: (li, 0, 0)),
            pl.BlockSpec((None, 1, d_pad), lambda mi, li: (li, 0, 0)),
        ]
        out_specs = pl.BlockSpec((tile_m, out_pad), lambda mi, li: (mi, 0))
        scratch_shapes = [pltpu.VMEM((tile_m, d_pad), jnp.float32)]
        kernel = _mlp_streamed_kernel
        semantics = ("parallel", "arbitrary")
        # In this structure the weight stack is re-streamed once per batch tile.
        bytes_accessed = io_bytes + (wbytes + bbytes) * m_tiles
        vmem_need = (2 * 4 * tile_m * (d_pad + out_pad)
                     + 4 * tile_m * d_pad
                     + 2 * (wbytes + bbytes) // max(n_layers, 1))

    # Explicit scoped-VMEM budget with headroom; capped for v7x's 64 MiB/TC.
    vmem_limit = int(min(64 * _MiB, max(32 * _MiB, 2 * vmem_need)))

    out_full = pl.pallas_call(
        kernel,
        out_shape=jax.ShapeDtypeStruct((m_pad, out_pad), jnp.float32),
        grid_spec=pltpu.PrefetchScalarGridSpec(
            num_scalar_prefetch=0,
            grid=grid,
            in_specs=in_specs,
            out_specs=out_specs,
            scratch_shapes=scratch_shapes,
        ),
        compiler_params=pltpu.CompilerParams(
            dimension_semantics=semantics,
            vmem_limit_bytes=vmem_limit,
        ),
        cost_estimate=pl.CostEstimate(
            flops=int(flops), transcendentals=0,
            bytes_accessed=int(bytes_accessed)),
    )(x_pad, w_stack, b_stack)

    return out_full[:m, :out_dim]


class GeneralModelPallas:
    """JAX/Pallas analogue of GeneralModel with layer() = [Linear, ReLU]."""

    def __init__(self, input_dim, output_dim, num_hidden_layers, hidden_dim,
                 weight_dtype=jnp.bfloat16):
        self.input_dim = input_dim
        self.output_dim = output_dim
        self.num_hidden_layers = num_hidden_layers
        self.hidden_dim = hidden_dim
        self.weight_dtype = weight_dtype
        # Lane-dense common padded feature dim, plus a (possibly narrower)
        # padded output width so the kernel only writes round_up(out,128) lanes.
        self._d_pad = _round_up(max(input_dim, hidden_dim, output_dim), 128)
        self._out_pad = _round_up(output_dim, 128)
        self.params = None
        self._w_stack = None
        self._b_stack = None

    def build_model(self, key):
        dims = ([self.input_dim]
                + [self.hidden_dim] * self.num_hidden_layers
                + [self.output_dim])
        n_layers = len(dims) - 1
        d_pad = self._d_pad

        params = []
        w_stack = jnp.zeros((n_layers, d_pad, d_pad), jnp.float32)
        b_stack = jnp.zeros((n_layers, 1, d_pad), jnp.float32)
        for i in range(n_layers):
            fan_in, fan_out = dims[i], dims[i + 1]
            key, wk, bk = jax.random.split(key, 3)
            # PyTorch nn.Linear-style uniform init bound.
            bound = 1.0 / float(fan_in) ** 0.5
            w = jax.random.uniform(wk, (fan_in, fan_out), jnp.float32,
                                   minval=-bound, maxval=bound)
            b = jax.random.uniform(bk, (1, fan_out), jnp.float32,
                                   minval=-bound, maxval=bound)
            params.append((w, b))
            # Zero padding keeps padded lanes exactly zero through ReLU.
            w_stack = w_stack.at[i, :fan_in, :fan_out].set(w)
            b_stack = b_stack.at[i, :, :fan_out].set(b)

        self.params = params
        # Weights in bf16 (native MXU input, half the HBM/VMEM bytes); bias,
        # epilogue and MXU accumulation stay f32.
        self._w_stack = jax.device_put(w_stack.astype(self.weight_dtype))
        self._b_stack = jax.device_put(b_stack)
        return params

    def forward(self, X):
        assert self.params is not None, "call build_model() first"
        m = X.shape[0]
        tile_m = _pick_tile_m(m)
        stack_bytes = (self._w_stack.size * self._w_stack.dtype.itemsize
                       + self._b_stack.size * self._b_stack.dtype.itemsize)
        resident = 2 * stack_bytes <= _RESIDENT_WEIGHT_BUDGET
        return _mlp_forward(
            X, self._w_stack, self._b_stack,
            tile_m=tile_m, d_pad=self._d_pad, out_pad=self._out_pad,
            out_dim=self.output_dim, resident=resident,
        )

    def name(self):
        return "GeneralModelPallas"

    def __str__(self):
        return self.name()


def _ref_forward(X, params, compute_dtype=jnp.bfloat16):
    """Pure-JAX reference mirroring the kernel numerics (bf16 MXU inputs,
    f32 accumulation, f32 bias + ReLU epilogue after every Linear)."""
    h = X.astype(jnp.float32)
    for (w, b) in params:
        y = jnp.dot(h.astype(compute_dtype), w.astype(compute_dtype),
                    preferred_element_type=jnp.float32)
        h = jnp.maximum(y + b, 0.0)
    return h


if __name__ == "__main__":
    key = jax.random.PRNGKey(0)
    batch, input_dim, hidden_dim, output_dim = 8, 32, 32, 16
    num_hidden_layers = 2  # -> 3 [Linear, ReLU] blocks total

    model = GeneralModelPallas(input_dim, output_dim, num_hidden_layers,
                               hidden_dim)
    key, pkey, xkey = jax.random.split(key, 3)
    params = model.build_model(pkey)

    X = jax.random.normal(xkey, (batch, input_dim), jnp.float32)

    out = jax.block_until_ready(model.forward(X))

    ref = _ref_forward(X, params)
    assert out.shape == (batch, output_dim), out.shape
    assert jnp.allclose(out, ref, atol=2e-3, rtol=2e-3), (
        "mismatch vs reference, max abs err = "
        + str(float(jnp.max(jnp.abs(out - ref)))))

    # TODO(synk): GeneralModel.layer() is abstract in the spec; this kernel fixes
    # the canonical concrete choice [nn.Linear, nn.ReLU] for every block.

    print("KERNEL_OK")
</pallas_src>

<mosaic_0001>
module attributes {stable_mosaic.version = 11 : i64} {
  func.func @_mlp_resident_kernel(%arg0: i32, %arg1: memref<8x128xf32, #tpu.memory_space<vmem>>, %arg2: memref<3x128x128xbf16, #tpu.memory_space<vmem>>, %arg3: memref<3x1x128xf32, #tpu.memory_space<vmem>>, %arg4: memref<8x128xf32, #tpu.memory_space<vmem>>) attributes {dimension_semantics = [#tpu.dimension_semantics<parallel>], iteration_bounds = array<i64: 1>, scalar_prefetch = 0 : i64, scratch_operands = 0 : i64, tpu.core_type = #tpu.core_type<tc>, window_params = [{transform_indices = @transform_0, window_bounds = array<i64: 8, 128>}, {pipeline_mode = #tpu.pipeline_mode<synchronous>, transform_indices = @transform_1, window_bounds = array<i64: 3, 128, 128>}, {pipeline_mode = #tpu.pipeline_mode<synchronous>, transform_indices = @transform_2, window_bounds = array<i64: 3, 1, 128>}, {transform_indices = @transform_3, window_bounds = array<i64: 8, 128>}]} {
    %c0 = arith.constant 0 : index
    %c0_0 = arith.constant 0 : index
    %0 = vector.load %arg1[%c0, %c0_0] : memref<8x128xf32, #tpu.memory_space<vmem>>, vector<8x128xf32>
    %1 = arith.truncf %0 : vector<8x128xf32> to vector<8x128xbf16>
    %c0_1 = arith.constant 0 : index
    %c0_2 = arith.constant 0 : index
    %c0_3 = arith.constant 0 : index
    %2 = vector.load %arg2[%c0_1, %c0_2, %c0_3] : memref<3x128x128xbf16, #tpu.memory_space<vmem>>, vector<1x128x128xbf16>
    %3 = vector.shape_cast %2 : vector<1x128x128xbf16> to vector<128x128xbf16>
    %cst = arith.constant dense<0.000000e+00> : vector<8x128xf32>
    %4 = tpu.matmul %1, %3, %cst {dimension_numbers = #tpu.dot_dimension_numbers<[1], [0], [0], [1], [0, 0, 1, 1], [], []>} : vector<8x128xbf16>, vector<128x128xbf16>, vector<8x128xf32> -> vector<8x128xf32>
    %c0_4 = arith.constant 0 : index
    %c0_5 = arith.constant 0 : index
    %c0_6 = arith.constant 0 : index
    %5 = vector.load %arg3[%c0_4, %c0_5, %c0_6] : memref<3x1x128xf32, #tpu.memory_space<vmem>>, vector<1x1x128xf32>
    %6 = vector.shape_cast %5 : vector<1x1x128xf32> to vector<1x128xf32>
    %7 = vector.broadcast %6 : vector<1x128xf32> to vector<8x128xf32>
    %8 = arith.addf %4, %7 : vector<8x128xf32>
    %cst_7 = arith.constant 0.000000e+00 : f32
    %9 = vector.broadcast %cst_7 : f32 to vector<8x128xf32>
    %10 = arith.maximumf %8, %9 : vector<8x128xf32>
    %11 = arith.truncf %10 : vector<8x128xf32> to vector<8x128xbf16>
    %c1 = arith.constant 1 : index
    %c0_8 = arith.constant 0 : index
    %c0_9 = arith.constant 0 : index
    %12 = vector.load %arg2[%c1, %c0_8, %c0_9] : memref<3x128x128xbf16, #tpu.memory_space<vmem>>, vector<1x128x128xbf16>
    %13 = vector.shape_cast %12 : vector<1x128x128xbf16> to vector<128x128xbf16>
    %cst_10 = arith.constant dense<0.000000e+00> : vector<8x128xf32>
    %14 = tpu.matmul %11, %13, %cst_10 {dimension_numbers = #tpu.dot_dimension_numbers<[1], [0], [0], [1], [0, 0, 1, 1], [], []>} : vector<8x128xbf16>, vector<128x128xbf16>, vector<8x128xf32> -> vector<8x128xf32>
    %c1_11 = arith.constant 1 : index
    %c0_12 = arith.constant 0 : index
    %c0_13 = arith.constant 0 : index
    %15 = vector.load %arg3[%c1_11, %c0_12, %c0_13] : memref<3x1x128xf32, #tpu.memory_space<vmem>>, vector<1x1x128xf32>
    %16 = vector.shape_cast %15 : vector<1x1x128xf32> to vector<1x128xf32>
    %17 = vector.broadcast %16 : vector<1x128xf32> to vector<8x128xf32>
    %18 = arith.addf %14, %17 : vector<8x128xf32>
    %cst_14 = arith.constant 0.000000e+00 : f32
    %19 = vector.broadcast %cst_14 : f32 to vector<8x128xf32>
    %20 = arith.maximumf %18, %19 : vector<8x128xf32>
    %21 = arith.truncf %20 : vector<8x128xf32> to vector<8x128xbf16>
    %c2 = arith.constant 2 : index
    %c0_15 = arith.constant 0 : index
    %c0_16 = arith.constant 0 : index
    %22 = vector.load %arg2[%c2, %c0_15, %c0_16] : memref<3x128x128xbf16, #tpu.memory_space<vmem>>, vector<1x128x128xbf16>
    %23 = vector.shape_cast %22 : vector<1x128x128xbf16> to vector<128x128xbf16>
    %cst_17 = arith.constant dense<0.000000e+00> : vector<8x128xf32>
    %24 = tpu.matmul %21, %23, %cst_17 {dimension_numbers = #tpu.dot_dimension_numbers<[1], [0], [0], [1], [0, 0, 1, 1], [], []>} : vector<8x128xbf16>, vector<128x128xbf16>, vector<8x128xf32> -> vector<8x128xf32>
    %c2_18 = arith.constant 2 : index
    %c0_19 = arith.constant 0 : index
    %c0_20 = arith.constant 0 : index
    %25 = vector.load %arg3[%c2_18, %c0_19, %c0_20] : memref<3x1x128xf32, #tpu.memory_space<vmem>>, vector<1x1x128xf32>
    %26 = vector.shape_cast %25 : vector<1x1x128xf32> to vector<1x128xf32>
    %27 = vector.broadcast %26 : vector<1x128xf32> to vector<8x128xf32>
    %28 = arith.addf %24, %27 : vector<8x128xf32>
    %cst_21 = arith.constant 0.000000e+00 : f32
    %29 = vector.broadcast %cst_21 : f32 to vector<8x128xf32>
    %30 = arith.maximumf %28, %29 : vector<8x128xf32>
    %c0_22 = arith.constant 0 : index
    %c0_23 = arith.constant 0 : index
    %31 = vector.load %arg4[%c0_22, %c0_23] : memref<8x128xf32, #tpu.memory_space<vmem>>, vector<8x128xf32>
    tpu.vector_store %arg4[%c0_22, %c0_23], %30 {strides = array<i32>} : memref<8x128xf32, #tpu.memory_space<vmem>>, vector<8x128xf32>,
    return
  }
  func.func @transform_0(%arg0: i32) -> (i32, i32) {
    %c0_i32 = arith.constant 0 : i32
    %c0_i32_0 = arith.constant 0 : i32
    return %arg0, %c0_i32 : i32, i32
  }
  func.func @transform_1(%arg0: i32) -> (i32, i32, i32) {
    %c0_i32 = arith.constant 0 : i32
    %c0_i32_0 = arith.constant 0 : i32
    %c0_i32_1 = arith.constant 0 : i32
    %c0_i32_2 = arith.constant 0 : i32
    return %c0_i32, %c0_i32_0, %c0_i32_1 : i32, i32, i32
  }
  func.func @transform_2(%arg0: i32) -> (i32, i32, i32) {
    %c0_i32 = arith.constant 0 : i32
    %c0_i32_0 = arith.constant 0 : i32
    %c0_i32_1 = arith.constant 0 : i32
    %c0_i32_2 = arith.constant 0 : i32
    return %c0_i32, %c0_i32_0, %c0_i32_1 : i32, i32, i32
  }
  func.func @transform_3(%arg0: i32) -> (i32, i32) {
    %c0_i32 = arith.constant 0 : i32
    %c0_i32_0 = arith.constant 0 : i32
    return %arg0, %c0_i32 : i32, i32
  }
}

</mosaic_0001>

<llo_original>
// kernel: _mlp_forward.1
$region0: #{_mlp_forward.1}
  #allocation0 [shape = 'u32[]', space=smem, size = 0x4, offset = 0x4, fixed_abs, tag = 'smem constant byte address 0x4 - core index']
  #allocation1 [shape = 'u32[144,128]{1,0:T(1,128)}', space=vmem, size = 0x12000, scoped, tag = 'internal scratch']
  %s0 = inlined_call_operand.vmem [shape: f32[8,128], index: 0, kind: input, shape index: {}]
  %s1 = inlined_call_operand.hbm [shape: bf16[3,128,128], index: 1, kind: input, shape index: {}]
  %s2 = inlined_call_operand.vmem [shape: f32[3,1,128], index: 2, kind: input, shape index: {}]
  %s3 = inlined_call_operand.hbm [shape: f32[8,128], index: 3, kind: output, shape index: {}]
  %s4 = sld [smem:[#allocation0]]
  $region26: #{_mlp_forward.1} parent=0
    _
  %s6 = ssub.s32 1, %s4
  %s7 = scalar_select 0, %s6, %s4
  $region1: #{_mlp_forward.1} parent=0
    #allocation2 [shape = 'u8[98304]{0}', space=vmem, size = 0x18000, scoped, tag = 'input window, operand 1, single buffered']
    #allocation3 [shape = 's32[1]{0}', space=sflag, size = 0x4, scoped, tag = 'scoped memory for _mlp_forward.1']
    #allocation4 [shape = 's32[1]{0}', space=sflag, size = 0x4, scoped, tag = 'scoped memory for _mlp_forward.1']
    #allocation5 [shape = 'u8[4096]{0}', space=vmem, size = 0x1000, scoped, tag = 'output window, operand 0, single buffered']
    %8 = vsyncpa [#allocation3], 0
    %9 = vsyncpa [#allocation4], 0
    // Predicated region
    $region2: #{_mlp_forward.1} parent=1 // pred_check
      _
    $region3: #{_mlp_forward.1} parent=1 // pred_check_branch
      %11 = sbr.rel (0) target = $region5
    $region4: #{_mlp_forward.1} parent=1 // pred_region
      _
    $region5: #{_mlp_forward.1} parent=1 // pred_fallthru
      _
    // Predicated region
    $region6: #{_mlp_forward.1} parent=1 // pred_check
      _
    $region7: #{_mlp_forward.1} parent=1 // pred_check_branch
      %13 = sbr.rel (0) target = $region9
    $region8: #{_mlp_forward.1} parent=1 // pred_region
      %s15 = ssub.s32 3072, 3072
      %16 = vsyncadd [#allocation3], %s15
      %s17 = sshll.u32 [#allocation2], 4
      %s18 = int_to_ptr.vmem [resolvable:$true] %s17
      %23 = dma.hbm_to_vmem [thread:$0]  %s1, 3072, %s18, [#allocation3], 64, 64, 4
    $region9: #{_mlp_forward.1} parent=1 // pred_fallthru
      _
    // Predicated region
    $region10: #{_mlp_forward.1} parent=1 // pred_check
      _
    $region11: #{_mlp_forward.1} parent=1 // pred_check_branch
      %25 = sbr.rel (0) target = $region13
    $region12: #{_mlp_forward.1} parent=1 // pred_region
      _
    $region13: #{_mlp_forward.1} parent=1 // pred_fallthru
      _
    // Predicated region
    $region14: #{_mlp_forward.1} parent=1 // pred_check
      _
    $region15: #{_mlp_forward.1} parent=1 // pred_check_branch
      %27 = sbr.rel (0) target = $region17
    $region16: #{_mlp_forward.1} parent=1 // pred_region
      %28 = dma.done [#allocation3], 3072
    $region17: #{_mlp_forward.1} parent=1 // pred_fallthru
      _
    %v30 = vld [vmem:[%s0] sm:$0xff]
    %v31 = vpack.c.bf16 %v30, %v30
    %v32 = vld [vmem:[#allocation2] sm:$0xf]
    %v33 = vld [vmem:[#allocation2 + $0x4] sm:$0xf]
    %v34 = vld [vmem:[#allocation2 + $0x8] sm:$0xf]
    %v35 = vld [vmem:[#allocation2 + $0xc] sm:$0xf]
    %v36 = vld [vmem:[#allocation2 + $0x10] sm:$0xf]
    %v37 = vld [vmem:[#allocation2 + $0x14] sm:$0xf]
    %v38 = vld [vmem:[#allocation2 + $0x18] sm:$0xf]
    %v39 = vld [vmem:[#allocation2 + $0x1c] sm:$0xf]
    %v40 = vld [vmem:[#allocation2 + $0x20] sm:$0xf]
    %v41 = vld [vmem:[#allocation2 + $0x24] sm:$0xf]
    %v42 = vld [vmem:[#allocation2 + $0x28] sm:$0xf]
    %v43 = vld [vmem:[#allocation2 + $0x2c] sm:$0xf]
    %v44 = vld [vmem:[#allocation2 + $0x30] sm:$0xf]
    %v45 = vld [vmem:[#allocation2 + $0x34] sm:$0xf]
    %v46 = vld [vmem:[#allocation2 + $0x38] sm:$0xf]
    %v47 = vld [vmem:[#allocation2 + $0x3c] sm:$0xf]
    %v48 = vld [vmem:[%s2] sm:$0x1]
    %v50 = vlaneseq
    %v51 = vshrl.u32 %v50, 7
    %v52 = vsub.s32 0, %v51
    %v53 = vrot.slane %v48, %v52
    %v71 = vunpack.c.l.b16 %v32
    %v72 = vunpack.c.l.b16 %v33
    %v73 = vunpack.c.l.b16 %v34
    %v74 = vunpack.c.l.b16 %v35
    %v75 = vunpack.c.l.b16 %v36
    %v76 = vunpack.c.l.b16 %v37
    %v77 = vunpack.c.l.b16 %v38
    %v78 = vunpack.c.l.b16 %v39
    %v79 = vunpack.c.l.b16 %v40
    %v80 = vunpack.c.l.b16 %v41
    %v81 = vunpack.c.l.b16 %v42
    %v82 = vunpack.c.l.b16 %v43
    %v83 = vunpack.c.l.b16 %v44
    %v84 = vunpack.c.l.b16 %v45
    %v85 = vunpack.c.l.b16 %v46
    %v86 = vunpack.c.l.b16 %v47
    %v87 = vpack.c.b16 %v72, %v71
    %v88 = vpack.c.b16 %v74, %v73
    %v89 = vpack.c.b16 %v76, %v75
    %v90 = vpack.c.b16 %v78, %v77
    %v91 = vpack.c.b16 %v80, %v79
    %v92 = vpack.c.b16 %v82, %v81
    %v93 = vpack.c.b16 %v84, %v83
    %v94 = vpack.c.b16 %v86, %v85
    %103 = vmatprep.subr.bf16.mxu0 0
    %104 = vmatpush1.bf16.msra.mxu0 %v94
    %105 = vmatprep.subr.bf16.mxu0 0
    %106 = vmatpush1.bf16.msra.mxu0 %v93
    %107 = vmatprep.subr.bf16.mxu0 0
    %108 = vmatpush1.bf16.msra.mxu0 %v92
    %109 = vmatprep.subr.bf16.mxu0 0
    %110 = vmatpush1.bf16.msra.mxu0 %v91
    %111 = vmatprep.subr.bf16.mxu0 0
    %112 = vmatpush1.bf16.msra.mxu0 %v90
    %113 = vmatprep.subr.bf16.mxu0 0
    %114 = vmatpush1.bf16.msra.mxu0 %v89
    %115 = vmatprep.subr.bf16.mxu0 0
    %116 = vmatpush1.bf16.msra.mxu0 %v88
    %117 = vmatprep.subr.bf16.mxu0 0
    %118 = vmatpush1.bf16.msra.mxu0 %v87
    %119 = vmatprep.subr.bf16.mxu0 0
    %120 = vmatpush2.bf16.msra.mxu0 0
    %121 = vmatprep.subr.bf16.mxu0 0
    %122 = vmatpush2.bf16.msra.mxu0 0
    %123 = vmatprep.subr.bf16.mxu0 0
    %124 = vmatpush2.bf16.msra.mxu0 0
    %125 = vmatprep.subr.bf16.mxu0 0
    %126 = vmatpush2.bf16.msra.mxu0 0
    %127 = vmatprep.subr.bf16.mxu0 0
    %128 = vmatpush2.bf16.msra.mxu0 0
    %129 = vmatprep.subr.bf16.mxu0 0
    %130 = vmatpush2.bf16.msra.mxu0 0
    %131 = vmatprep.subr.bf16.mxu0 0
    %132 = vmatpush2.bf16.msra.mxu0 0
    %133 = vmatprep.subr.bf16.mxu0 0
    %134 = vmatpush2.bf16.msra.mxu0 0
    %135 = vmatprep.mubr.bf16.mxu0 0
    %136 = vmatmul.mubr.bf16.gmra.mxu0 %v31
    %v137 = vpop.f32.mrf.mxu0
    %v138 = vadd.f32 %v53, %v137
    %v139 = vpop.f32.mrf.mxu0
    %v140 = vpop.f32.mrf.mxu0
    %v141 = vpop.f32.mrf.mxu0
    %142 = vdwg.mxu0
    %v143 = vmax.f32 %v138, 0.0
    %v144 = vpack.c.bf16 %v143, %v143
    %s145 = scalar_lea.vmem [#allocation2], 64
    %v146 = vld [vmem:[%s145] sm:$0xf]
    %v147 = vld [vmem:[%s145 + $0x4] sm:$0xf]
    %v148 = vld [vmem:[%s145 + $0x8] sm:$0xf]
    %v149 = vld [vmem:[%s145 + $0xc] sm:$0xf]
    %v150 = vld [vmem:[%s145 + $0x10] sm:$0xf]
    %v151 = vld [vmem:[%s145 + $0x14] sm:$0xf]
    %v152 = vld [vmem:[%s145 + $0x18] sm:$0xf]
    %v153 = vld [vmem:[%s145 + $0x1c] sm:$0xf]
    %v154 = vld [vmem:[%s145 + $0x20] sm:$0xf]
    %v155 = vld [vmem:[%s145 + $0x24] sm:$0xf]
    %v156 = vld [vmem:[%s145 + $0x28] sm:$0xf]
    %v157 = vld [vmem:[%s145 + $0x2c] sm:$0xf]
    %v158 = vld [vmem:[%s145 + $0x30] sm:$0xf]
    %v159 = vld [vmem:[%s145 + $0x34] sm:$0xf]
    %v160 = vld [vmem:[%s145 + $0x38] sm:$0xf]
    %v161 = vld [vmem:[%s145 + $0x3c] sm:$0xf]
    %s162 = scalar_lea.vmem %s2, 1
    %v163 = vld [vmem:[%s162] sm:$0x1]
    %v165 = vlaneseq
    %v166 = vshrl.u32 %v165, 7
    %v167 = vsub.s32 0, %v166
    %v168 = vrot.slane %v163, %v167
    %v186 = vunpack.c.l.b16 %v146
    %v187 = vunpack.c.l.b16 %v147
    %v188 = vunpack.c.l.b16 %v148
    %v189 = vunpack.c.l.b16 %v149
    %v190 = vunpack.c.l.b16 %v150
    %v191 = vunpack.c.l.b16 %v151
    %v192 = vunpack.c.l.b16 %v152
    %v193 = vunpack.c.l.b16 %v153
    %v194 = vunpack.c.l.b16 %v154
    %v195 = vunpack.c.l.b16 %v155
    %v196 = vunpack.c.l.b16 %v156
    %v197 = vunpack.c.l.b16 %v157
    %v198 = vunpack.c.l.b16 %v158
    %v199 = vunpack.c.l.b16 %v159
    %v200 = vunpack.c.l.b16 %v160
    %v201 = vunpack.c.l.b16 %v161
    %v202 = vpack.c.b16 %v187, %v186
    %v203 = vpack.c.b16 %v189, %v188
    %v204 = vpack.c.b16 %v191, %v190
    %v205 = vpack.c.b16 %v193, %v192
    %v206 = vpack.c.b16 %v195, %v194
    %v207 = vpack.c.b16 %v197, %v196
    %v208 = vpack.c.b16 %v199, %v198
    %v209 = vpack.c.b16 %v201, %v200
    %218 = vmatprep.subr.bf16.mxu0 0
    %219 = vmatpush1.bf16.msra.mxu0 %v209
    %220 = vmatprep.subr.bf16.mxu0 0
    %221 = vmatpush1.bf16.msra.mxu0 %v208
    %222 = vmatprep.subr.bf16.mxu0 0
    %223 = vmatpush1.bf16.msra.mxu0 %v207
    %224 = vmatprep.subr.bf16.mxu0 0
    %225 = vmatpush1.bf16.msra.mxu0 %v206
    %226 = vmatprep.subr.bf16.mxu0 0
    %227 = vmatpush1.bf16.msra.mxu0 %v205
    %228 = vmatprep.subr.bf16.mxu0 0
    %229 = vmatpush1.bf16.msra.mxu0 %v204
    %230 = vmatprep.subr.bf16.mxu0 0
    %231 = vmatpush1.bf16.msra.mxu0 %v203
    %232 = vmatprep.subr.bf16.mxu0 0
    %233 = vmatpush1.bf16.msra.mxu0 %v202
    %234 = vmatprep.subr.bf16.mxu0 0
    %235 = vmatpush2.bf16.msra.mxu0 0
    %236 = vmatprep.subr.bf16.mxu0 0
    %237 = vmatpush2.bf16.msra.mxu0 0
    %238 = vmatprep.subr.bf16.mxu0 0
    %239 = vmatpush2.bf16.msra.mxu0 0
    %240 = vmatprep.subr.bf16.mxu0 0
    %241 = vmatpush2.bf16.msra.mxu0 0
    %242 = vmatprep.subr.bf16.mxu0 0
    %243 = vmatpush2.bf16.msra.mxu0 0
    %244 = vmatprep.subr.bf16.mxu0 0
    %245 = vmatpush2.bf16.msra.mxu0 0
    %246 = vmatprep.subr.bf16.mxu0 0
    %247 = vmatpush2.bf16.msra.mxu0 0
    %248 = vmatprep.subr.bf16.mxu0 0
    %249 = vmatpush2.bf16.msra.mxu0 0
    %250 = vmatprep.mubr.bf16.mxu0 0
    %251 = vmatmul.mubr.bf16.gmra.mxu0 %v144
    %v252 = vpop.f32.mrf.mxu0
    %v253 = vadd.f32 %v168, %v252
    %v254 = vpop.f32.mrf.mxu0
    %v255 = vpop.f32.mrf.mxu0
    %v256 = vpop.f32.mrf.mxu0
    %257 = vdwg.mxu0
    %v258 = vmax.f32 %v253, 0.0
    %v259 = vpack.c.bf16 %v258, %v258
    %s260 = scalar_lea.vmem [#allocation2], 128
    %v261 = vld [vmem:[%s260] sm:$0xf]
    %v262 = vld [vmem:[%s260 + $0x4] sm:$0xf]
    %v263 = vld [vmem:[%s260 + $0x8] sm:$0xf]
    %v264 = vld [vmem:[%s260 + $0xc] sm:$0xf]
    %v265 = vld [vmem:[%s260 + $0x10] sm:$0xf]
    %v266 = vld [vmem:[%s260 + $0x14] sm:$0xf]
    %v267 = vld [vmem:[%s260 + $0x18] sm:$0xf]
    %v268 = vld [vmem:[%s260 + $0x1c] sm:$0xf]
    %v269 = vld [vmem:[%s260 + $0x20] sm:$0xf]
    %v270 = vld [vmem:[%s260 + $0x24] sm:$0xf]
    %v271 = vld [vmem:[%s260 + $0x28] sm:$0xf]
    %v272 = vld [vmem:[%s260 + $0x2c] sm:$0xf]
    %v273 = vld [vmem:[%s260 + $0x30] sm:$0xf]
    %v274 = vld [vmem:[%s260 + $0x34] sm:$0xf]
    %v275 = vld [vmem:[%s260 + $0x38] sm:$0xf]
    %v276 = vld [vmem:[%s260 + $0x3c] sm:$0xf]
    %s277 = scalar_lea.vmem %s2, 2
    %v278 = vld [vmem:[%s277] sm:$0x1]
    %v280 = vlaneseq
    %v281 = vshrl.u32 %v280, 7
    %v282 = vsub.s32 0, %v281
    %v283 = vrot.slane %v278, %v282
    %v301 = vunpack.c.l.b16 %v261
    %v302 = vunpack.c.l.b16 %v262
    %v303 = vunpack.c.l.b16 %v263
    %v304 = vunpack.c.l.b16 %v264
    %v305 = vunpack.c.l.b16 %v265
    %v306 = vunpack.c.l.b16 %v266
    %v307 = vunpack.c.l.b16 %v267
    %v308 = vunpack.c.l.b16 %v268
    %v309 = vunpack.c.l.b16 %v269
    %v310 = vunpack.c.l.b16 %v270
    %v311 = vunpack.c.l.b16 %v271
    %v312 = vunpack.c.l.b16 %v272
    %v313 = vunpack.c.l.b16 %v273
    %v314 = vunpack.c.l.b16 %v274
    %v315 = vunpack.c.l.b16 %v275
    %v316 = vunpack.c.l.b16 %v276
    %v317 = vpack.c.b16 %v302, %v301
    %v318 = vpack.c.b16 %v304, %v303
    %v319 = vpack.c.b16 %v306, %v305
    %v320 = vpack.c.b16 %v308, %v307
    %v321 = vpack.c.b16 %v310, %v309
    %v322 = vpack.c.b16 %v312, %v311
    %v323 = vpack.c.b16 %v314, %v313
    %v324 = vpack.c.b16 %v316, %v315
    %333 = vmatprep.subr.bf16.mxu0 0
    %334 = vmatpush1.bf16.msra.mxu0 %v324
    %335 = vmatprep.subr.bf16.mxu0 0
    %336 = vmatpush1.bf16.msra.mxu0 %v323
    %337 = vmatprep.subr.bf16.mxu0 0
    %338 = vmatpush1.bf16.msra.mxu0 %v322
    %339 = vmatprep.subr.bf16.mxu0 0
    %340 = vmatpush1.bf16.msra.mxu0 %v321
    %341 = vmatprep.subr.bf16.mxu0 0
    %342 = vmatpush1.bf16.msra.mxu0 %v320
    %343 = vmatprep.subr.bf16.mxu0 0
    %344 = vmatpush1.bf16.msra.mxu0 %v319
    %345 = vmatprep.subr.bf16.mxu0 0
    %346 = vmatpush1.bf16.msra.mxu0 %v318
    %347 = vmatprep.subr.bf16.mxu0 0
    %348 = vmatpush1.bf16.msra.mxu0 %v317
    %349 = vmatprep.subr.bf16.mxu0 0
    %350 = vmatpush2.bf16.msra.mxu0 0
    %351 = vmatprep.subr.bf16.mxu0 0
    %352 = vmatpush2.bf16.msra.mxu0 0
    %353 = vmatprep.subr.bf16.mxu0 0
    %354 = vmatpush2.bf16.msra.mxu0 0
    %355 = vmatprep.subr.bf16.mxu0 0
    %356 = vmatpush2.bf16.msra.mxu0 0
    %357 = vmatprep.subr.bf16.mxu0 0
    %358 = vmatpush2.bf16.msra.mxu0 0
    %359 = vmatprep.subr.bf16.mxu0 0
    %360 = vmatpush2.bf16.msra.mxu0 0
    %361 = vmatprep.subr.bf16.mxu0 0
    %362 = vmatpush2.bf16.msra.mxu0 0
    %363 = vmatprep.subr.bf16.mxu0 0
    %364 = vmatpush2.bf16.msra.mxu0 0
    %365 = vmatprep.mubr.bf16.mxu0 0
    %366 = vmatmul.mubr.bf16.gmra.mxu0 %v259
    %v367 = vpop.f32.mrf.mxu0
    %v368 = vadd.f32 %v283, %v367
    %v369 = vpop.f32.mrf.mxu0
    %v370 = vpop.f32.mrf.mxu0
    %v371 = vpop.f32.mrf.mxu0
    %372 = vdwg.mxu0
    %v373 = vmax.f32 %v368, 0.0
    %374 = vst [vmem:[#allocation5] sm:$0xff] %v373
    // Predicated region
    $region18: #{_mlp_forward.1} parent=1 // pred_check
      _
    $region19: #{_mlp_forward.1} parent=1 // pred_check_branch
      %376 = sbr.rel (0) target = $region21
    $region20: #{_mlp_forward.1} parent=1 // pred_region
      %s378 = ssub.s32 128, 128
      %379 = vsyncadd [#allocation4], %s378
      %s381 = sshll.u32 [#allocation5], 4
      %s382 = int_to_ptr.vmem [resolvable:$true] %s381
      %384 = dma.vmem_to_hbm [thread:$0]  %s382, 128, %s3, [#allocation4]
    $region21: #{_mlp_forward.1} parent=1 // pred_fallthru
      _
    // Predicated region
    $region22: #{_mlp_forward.1} parent=1 // pred_check
      _
    $region23: #{_mlp_forward.1} parent=1 // pred_check_branch
      %386 = sbr.rel (0) target = $region25
    $region24: #{_mlp_forward.1} parent=1 // pred_region
      %387 = dma.done [#allocation4], 128
    $region25: #{_mlp_forward.1} parent=1 // pred_fallthru
      _
    %388 = vsyncpa [#allocation3], 1
    %389 = vsyncpa [#allocation4], 1

</llo_original>
